<compile_context>
chip_gen: v6e
topology: v6e:2x2x1
jax: 0.10.0
libtpu: 0.0.40
codegen_flags: <defaults>
</compile_context>

<pallas_src>
import functools

import jax
import jax.numpy as jnp
from jax.experimental import pallas as pl
from jax.experimental.pallas import tpu as pltpu


def _gather_kernel(ids_ref, w_hbm_ref, out_ref, sems, *, tn):
    """Gather `tn` embedding rows for token tile `i` via per-row async DMAs.

    ids_ref   : (Np,)   int32 token ids, scalar-prefetched into SMEM
    w_hbm_ref : (V, D)  embedding table, left in HBM (no auto-DMA)
    out_ref   : (tn, D) output tile in VMEM (pipelined write-back)
    sems      : (tn,)   DMA completion semaphores, one per row
    """
    base = pl.program_id(0) * tn
    vmax = w_hbm_ref.shape[0] - 1

    # Issue all row DMAs first so they are in flight concurrently.
    for t in range(tn):
        # Clamp guards the HBM DMA against out-of-range ids (torch would raise;
        # an unchecked OOB DMA could fault the chip).
        row = jnp.minimum(ids_ref[base + t], vmax)
        pltpu.make_async_copy(
            w_hbm_ref.at[pl.ds(row, 1), :],
            out_ref.at[pl.ds(t, 1), :],
            sems.at[t],
        ).start()

    # Then wait for each one (only dst shape + semaphore matter for .wait()).
    for t in range(tn):
        pltpu.make_async_copy(
            w_hbm_ref.at[pl.ds(0, 1), :],
            out_ref.at[pl.ds(t, 1), :],
            sems.at[t],
        ).wait()


def parallel_embedding_forward(ids, weight, *, tn=32):
    """ids: (B, S) int token indices; weight: (V, D) -> (B, S, D) in weight dtype.

    tn = tokens gathered per grid step (amortizes the ~0.35us per-step overhead
    across tn row DMAs).  VMEM use is just the double-buffered (tn, D) output
    tile, so tiles stay far below even v7x's 64 MiB budget.
    """
    B, S = ids.shape
    V, D = weight.shape
    N = B * S

    # Pad token count up to a multiple of the token tile (padded rows gather
    # row 0 and are sliced off below).
    n_pad = (-N) % tn
    ids_flat = ids.reshape(N).astype(jnp.int32)
    if n_pad:
        ids_flat = jnp.concatenate([ids_flat, jnp.zeros((n_pad,), jnp.int32)])
    Np = ids_flat.shape[0]

    grid = (Np // tn,)

    out = pl.pallas_call(
        functools.partial(_gather_kernel, tn=tn),
        out_shape=jax.ShapeDtypeStruct((Np, D), weight.dtype),
        grid_spec=pltpu.PrefetchScalarGridSpec(
            num_scalar_prefetch=1,                      # ids -> SMEM
            grid=grid,
            in_specs=[
                pl.BlockSpec(memory_space=pl.ANY),      # weight stays in HBM
            ],
            out_specs=pl.BlockSpec((tn, D), lambda i, ids: (i, 0)),
            scratch_shapes=[pltpu.SemaphoreType.DMA((tn,))],
        ),
        compiler_params=pltpu.CompilerParams(
            dimension_semantics=("parallel",),          # token axis splits across TCs (v7x)
        ),
    )(ids_flat, weight)

    return out[:N].reshape(B, S, D)


def make_parallel_embedding_params(key, num_embeddings, embedding_dim,
                                   world_size=1, rank=0):
    """Deterministic xavier_normal_ init of the (V, D/world_size) weight shard."""
    assert embedding_dim % world_size == 0
    d_part = embedding_dim // world_size
    # xavier normal over the master (V, D) weight, then take this rank's columns.
    std = (2.0 / (num_embeddings + embedding_dim)) ** 0.5
    master = jax.random.normal(key, (num_embeddings, embedding_dim),
                               dtype=jnp.float32) * std
    shard = master[:, rank * d_part:(rank + 1) * d_part]
    return shard
    # TODO(synk): cross-device all-gather of the sharded embedding output
    # (world_size > 1) is a collective outside this single-device kernel.


if __name__ == "__main__":
    key = jax.random.PRNGKey(0)
    k_w, k_ids = jax.random.split(key)

    num_embeddings = 256   # vocabulary size
    embedding_dim = 128    # hidden size
    B, S = 2, 8

    weight = make_parallel_embedding_params(k_w, num_embeddings, embedding_dim)
    ids = jax.random.randint(k_ids, (B, S), 0, num_embeddings, dtype=jnp.int32)

    out = parallel_embedding_forward(ids, weight, tn=8)
    out = jax.block_until_ready(out)

    # Reference: plain JAX embedding lookup.
    ref = jnp.take(weight, ids, axis=0)
    assert out.shape == (B, S, embedding_dim)
    assert jnp.allclose(out, ref, atol=1e-6, rtol=1e-6), "mismatch vs reference"

    print("KERNEL_OK")
</pallas_src>

<mosaic_0001>
module attributes {stable_mosaic.version = 11 : i64} {
  func.func @_gather_kernel(%arg0: i32, %arg1: memref<16xi32, #tpu.memory_space<smem>>, %arg2: memref<256x128xf32, #tpu.memory_space<any>>, %arg3: memref<8x128xf32, #tpu.memory_space<vmem>>, %arg4: memref<8x!tpu.dma_semaphore, #tpu.memory_space<semaphore_mem>>) attributes {dimension_semantics = [#tpu.dimension_semantics<parallel>], iteration_bounds = array<i64: 2>, scalar_prefetch = 1 : i64, scratch_operands = 1 : i64, tpu.core_type = #tpu.core_type<tc>, window_params = [{}, {transform_indices = @transform_1, window_bounds = array<i64: 8, 128>}]} {
    %c8_i32 = arith.constant 8 : i32
    %0 = arith.muli %arg0, %c8_i32 : i32
    %c0_i32 = arith.constant 0 : i32
    %1 = arith.addi %0, %c0_i32 : i32
    %2 = arith.index_cast %1 : i32 to index
    %3 = memref.load %arg1[%2] : memref<16xi32, #tpu.memory_space<smem>>
    %c255_i32 = arith.constant 255 : i32
    %4 = arith.minsi %3, %c255_i32 : i32
    %c0_i32_0 = arith.constant 0 : i32
    %c0_i32_1 = arith.constant 0 : i32
    %5 = tpu.memref_slice %arg2[%4, %c0_i32_1] : memref<256x128xf32, #tpu.memory_space<any>> -> memref<1x128xf32, #tpu.memory_space<any>>
    %c0_i32_2 = arith.constant 0 : i32
    %c0_i32_3 = arith.constant 0 : i32
    %6 = tpu.memref_slice %arg3[%c0_i32_2, %c0_i32_3] : memref<8x128xf32, #tpu.memory_space<vmem>> -> memref<1x128xf32, #tpu.memory_space<vmem>>
    %7 = tpu.memref_slice %arg4[%c0_i32_0] : memref<8x!tpu.dma_semaphore, #tpu.memory_space<semaphore_mem>> -> memref<1x!tpu.dma_semaphore, #tpu.memory_space<semaphore_mem>>
    %8 = tpu.memref_squeeze %7 : memref<1x!tpu.dma_semaphore, #tpu.memory_space<semaphore_mem>> -> memref<!tpu.dma_semaphore, #tpu.memory_space<semaphore_mem>>
    tpu.enqueue_dma source(%5 : memref<1x128xf32, #tpu.memory_space<any>>) target(%6 : memref<1x128xf32, #tpu.memory_space<vmem>>) target_semaphore(%8 : memref<!tpu.dma_semaphore, #tpu.memory_space<semaphore_mem>>)
    %c1_i32 = arith.constant 1 : i32
    %9 = arith.addi %0, %c1_i32 : i32
    %10 = arith.index_cast %9 : i32 to index
    %11 = memref.load %arg1[%10] : memref<16xi32, #tpu.memory_space<smem>>
    %c255_i32_4 = arith.constant 255 : i32
    %12 = arith.minsi %11, %c255_i32_4 : i32
    %c1_i32_5 = arith.constant 1 : i32
    %c0_i32_6 = arith.constant 0 : i32
    %13 = tpu.memref_slice %arg2[%12, %c0_i32_6] : memref<256x128xf32, #tpu.memory_space<any>> -> memref<1x128xf32, #tpu.memory_space<any>>
    %c1_i32_7 = arith.constant 1 : i32
    %c0_i32_8 = arith.constant 0 : i32
    %14 = tpu.memref_slice %arg3[%c1_i32_7, %c0_i32_8] : memref<8x128xf32, #tpu.memory_space<vmem>> -> memref<1x128xf32, #tpu.memory_space<vmem>>
    %15 = tpu.memref_slice %arg4[%c1_i32_5] : memref<8x!tpu.dma_semaphore, #tpu.memory_space<semaphore_mem>> -> memref<1x!tpu.dma_semaphore, #tpu.memory_space<semaphore_mem>>
    %16 = tpu.memref_squeeze %15 : memref<1x!tpu.dma_semaphore, #tpu.memory_space<semaphore_mem>> -> memref<!tpu.dma_semaphore, #tpu.memory_space<semaphore_mem>>
    tpu.enqueue_dma source(%13 : memref<1x128xf32, #tpu.memory_space<any>>) target(%14 : memref<1x128xf32, #tpu.memory_space<vmem>>) target_semaphore(%16 : memref<!tpu.dma_semaphore, #tpu.memory_space<semaphore_mem>>)
    %c2_i32 = arith.constant 2 : i32
    %17 = arith.addi %0, %c2_i32 : i32
    %18 = arith.index_cast %17 : i32 to index
    %19 = memref.load %arg1[%18] : memref<16xi32, #tpu.memory_space<smem>>
    %c255_i32_9 = arith.constant 255 : i32
    %20 = arith.minsi %19, %c255_i32_9 : i32
    %c2_i32_10 = arith.constant 2 : i32
    %c0_i32_11 = arith.constant 0 : i32
    %21 = tpu.memref_slice %arg2[%20, %c0_i32_11] : memref<256x128xf32, #tpu.memory_space<any>> -> memref<1x128xf32, #tpu.memory_space<any>>
    %c2_i32_12 = arith.constant 2 : i32
    %c0_i32_13 = arith.constant 0 : i32
    %22 = tpu.memref_slice %arg3[%c2_i32_12, %c0_i32_13] : memref<8x128xf32, #tpu.memory_space<vmem>> -> memref<1x128xf32, #tpu.memory_space<vmem>>
    %23 = tpu.memref_slice %arg4[%c2_i32_10] : memref<8x!tpu.dma_semaphore, #tpu.memory_space<semaphore_mem>> -> memref<1x!tpu.dma_semaphore, #tpu.memory_space<semaphore_mem>>
    %24 = tpu.memref_squeeze %23 : memref<1x!tpu.dma_semaphore, #tpu.memory_space<semaphore_mem>> -> memref<!tpu.dma_semaphore, #tpu.memory_space<semaphore_mem>>
    tpu.enqueue_dma source(%21 : memref<1x128xf32, #tpu.memory_space<any>>) target(%22 : memref<1x128xf32, #tpu.memory_space<vmem>>) target_semaphore(%24 : memref<!tpu.dma_semaphore, #tpu.memory_space<semaphore_mem>>)
    %c3_i32 = arith.constant 3 : i32
    %25 = arith.addi %0, %c3_i32 : i32
    %26 = arith.index_cast %25 : i32 to index
    %27 = memref.load %arg1[%26] : memref<16xi32, #tpu.memory_space<smem>>
    %c255_i32_14 = arith.constant 255 : i32
    %28 = arith.minsi %27, %c255_i32_14 : i32
    %c3_i32_15 = arith.constant 3 : i32
    %c0_i32_16 = arith.constant 0 : i32
    %29 = tpu.memref_slice %arg2[%28, %c0_i32_16] : memref<256x128xf32, #tpu.memory_space<any>> -> memref<1x128xf32, #tpu.memory_space<any>>
    %c3_i32_17 = arith.constant 3 : i32
    %c0_i32_18 = arith.constant 0 : i32
    %30 = tpu.memref_slice %arg3[%c3_i32_17, %c0_i32_18] : memref<8x128xf32, #tpu.memory_space<vmem>> -> memref<1x128xf32, #tpu.memory_space<vmem>>
    %31 = tpu.memref_slice %arg4[%c3_i32_15] : memref<8x!tpu.dma_semaphore, #tpu.memory_space<semaphore_mem>> -> memref<1x!tpu.dma_semaphore, #tpu.memory_space<semaphore_mem>>
    %32 = tpu.memref_squeeze %31 : memref<1x!tpu.dma_semaphore, #tpu.memory_space<semaphore_mem>> -> memref<!tpu.dma_semaphore, #tpu.memory_space<semaphore_mem>>
    tpu.enqueue_dma source(%29 : memref<1x128xf32, #tpu.memory_space<any>>) target(%30 : memref<1x128xf32, #tpu.memory_space<vmem>>) target_semaphore(%32 : memref<!tpu.dma_semaphore, #tpu.memory_space<semaphore_mem>>)
    %c4_i32 = arith.constant 4 : i32
    %33 = arith.addi %0, %c4_i32 : i32
    %34 = arith.index_cast %33 : i32 to index
    %35 = memref.load %arg1[%34] : memref<16xi32, #tpu.memory_space<smem>>
    %c255_i32_19 = arith.constant 255 : i32
    %36 = arith.minsi %35, %c255_i32_19 : i32
    %c4_i32_20 = arith.constant 4 : i32
    %c0_i32_21 = arith.constant 0 : i32
    %37 = tpu.memref_slice %arg2[%36, %c0_i32_21] : memref<256x128xf32, #tpu.memory_space<any>> -> memref<1x128xf32, #tpu.memory_space<any>>
    %c4_i32_22 = arith.constant 4 : i32
    %c0_i32_23 = arith.constant 0 : i32
    %38 = tpu.memref_slice %arg3[%c4_i32_22, %c0_i32_23] : memref<8x128xf32, #tpu.memory_space<vmem>> -> memref<1x128xf32, #tpu.memory_space<vmem>>
    %39 = tpu.memref_slice %arg4[%c4_i32_20] : memref<8x!tpu.dma_semaphore, #tpu.memory_space<semaphore_mem>> -> memref<1x!tpu.dma_semaphore, #tpu.memory_space<semaphore_mem>>
    %40 = tpu.memref_squeeze %39 : memref<1x!tpu.dma_semaphore, #tpu.memory_space<semaphore_mem>> -> memref<!tpu.dma_semaphore, #tpu.memory_space<semaphore_mem>>
    tpu.enqueue_dma source(%37 : memref<1x128xf32, #tpu.memory_space<any>>) target(%38 : memref<1x128xf32, #tpu.memory_space<vmem>>) target_semaphore(%40 : memref<!tpu.dma_semaphore, #tpu.memory_space<semaphore_mem>>)
    %c5_i32 = arith.constant 5 : i32
    %41 = arith.addi %0, %c5_i32 : i32
    %42 = arith.index_cast %41 : i32 to index
    %43 = memref.load %arg1[%42] : memref<16xi32, #tpu.memory_space<smem>>
    %c255_i32_24 = arith.constant 255 : i32
    %44 = arith.minsi %43, %c255_i32_24 : i32
    %c5_i32_25 = arith.constant 5 : i32
    %c0_i32_26 = arith.constant 0 : i32
    %45 = tpu.memref_slice %arg2[%44, %c0_i32_26] : memref<256x128xf32, #tpu.memory_space<any>> -> memref<1x128xf32, #tpu.memory_space<any>>
    %c5_i32_27 = arith.constant 5 : i32
    %c0_i32_28 = arith.constant 0 : i32
    %46 = tpu.memref_slice %arg3[%c5_i32_27, %c0_i32_28] : memref<8x128xf32, #tpu.memory_space<vmem>> -> memref<1x128xf32, #tpu.memory_space<vmem>>
    %47 = tpu.memref_slice %arg4[%c5_i32_25] : memref<8x!tpu.dma_semaphore, #tpu.memory_space<semaphore_mem>> -> memref<1x!tpu.dma_semaphore, #tpu.memory_space<semaphore_mem>>
    %48 = tpu.memref_squeeze %47 : memref<1x!tpu.dma_semaphore, #tpu.memory_space<semaphore_mem>> -> memref<!tpu.dma_semaphore, #tpu.memory_space<semaphore_mem>>
    tpu.enqueue_dma source(%45 : memref<1x128xf32, #tpu.memory_space<any>>) target(%46 : memref<1x128xf32, #tpu.memory_space<vmem>>) target_semaphore(%48 : memref<!tpu.dma_semaphore, #tpu.memory_space<semaphore_mem>>)
    %c6_i32 = arith.constant 6 : i32
    %49 = arith.addi %0, %c6_i32 : i32
    %50 = arith.index_cast %49 : i32 to index
    %51 = memref.load %arg1[%50] : memref<16xi32, #tpu.memory_space<smem>>
    %c255_i32_29 = arith.constant 255 : i32
    %52 = arith.minsi %51, %c255_i32_29 : i32
    %c6_i32_30 = arith.constant 6 : i32
    %c0_i32_31 = arith.constant 0 : i32
    %53 = tpu.memref_slice %arg2[%52, %c0_i32_31] : memref<256x128xf32, #tpu.memory_space<any>> -> memref<1x128xf32, #tpu.memory_space<any>>
    %c6_i32_32 = arith.constant 6 : i32
    %c0_i32_33 = arith.constant 0 : i32
    %54 = tpu.memref_slice %arg3[%c6_i32_32, %c0_i32_33] : memref<8x128xf32, #tpu.memory_space<vmem>> -> memref<1x128xf32, #tpu.memory_space<vmem>>
    %55 = tpu.memref_slice %arg4[%c6_i32_30] : memref<8x!tpu.dma_semaphore, #tpu.memory_space<semaphore_mem>> -> memref<1x!tpu.dma_semaphore, #tpu.memory_space<semaphore_mem>>
    %56 = tpu.memref_squeeze %55 : memref<1x!tpu.dma_semaphore, #tpu.memory_space<semaphore_mem>> -> memref<!tpu.dma_semaphore, #tpu.memory_space<semaphore_mem>>
    tpu.enqueue_dma source(%53 : memref<1x128xf32, #tpu.memory_space<any>>) target(%54 : memref<1x128xf32, #tpu.memory_space<vmem>>) target_semaphore(%56 : memref<!tpu.dma_semaphore, #tpu.memory_space<semaphore_mem>>)
    %c7_i32 = arith.constant 7 : i32
    %57 = arith.addi %0, %c7_i32 : i32
    %58 = arith.index_cast %57 : i32 to index
    %59 = memref.load %arg1[%58] : memref<16xi32, #tpu.memory_space<smem>>
    %c255_i32_34 = arith.constant 255 : i32
    %60 = arith.minsi %59, %c255_i32_34 : i32
    %c7_i32_35 = arith.constant 7 : i32
    %c0_i32_36 = arith.constant 0 : i32
    %61 = tpu.memref_slice %arg2[%60, %c0_i32_36] : memref<256x128xf32, #tpu.memory_space<any>> -> memref<1x128xf32, #tpu.memory_space<any>>
    %c7_i32_37 = arith.constant 7 : i32
    %c0_i32_38 = arith.constant 0 : i32
    %62 = tpu.memref_slice %arg3[%c7_i32_37, %c0_i32_38] : memref<8x128xf32, #tpu.memory_space<vmem>> -> memref<1x128xf32, #tpu.memory_space<vmem>>
    %63 = tpu.memref_slice %arg4[%c7_i32_35] : memref<8x!tpu.dma_semaphore, #tpu.memory_space<semaphore_mem>> -> memref<1x!tpu.dma_semaphore, #tpu.memory_space<semaphore_mem>>
    %64 = tpu.memref_squeeze %63 : memref<1x!tpu.dma_semaphore, #tpu.memory_space<semaphore_mem>> -> memref<!tpu.dma_semaphore, #tpu.memory_space<semaphore_mem>>
    tpu.enqueue_dma source(%61 : memref<1x128xf32, #tpu.memory_space<any>>) target(%62 : memref<1x128xf32, #tpu.memory_space<vmem>>) target_semaphore(%64 : memref<!tpu.dma_semaphore, #tpu.memory_space<semaphore_mem>>)
    %c0_i32_39 = arith.constant 0 : i32
    %c0_i32_40 = arith.constant 0 : i32
    %c0_i32_41 = arith.constant 0 : i32
    %65 = tpu.memref_slice %arg2[%c0_i32_40, %c0_i32_41] : memref<256x128xf32, #tpu.memory_space<any>> -> memref<1x128xf32, #tpu.memory_space<any>>
    %c0_i32_42 = arith.constant 0 : i32
    %c0_i32_43 = arith.constant 0 : i32
    %66 = tpu.memref_slice %arg3[%c0_i32_42, %c0_i32_43] : memref<8x128xf32, #tpu.memory_space<vmem>> -> memref<1x128xf32, #tpu.memory_space<vmem>>
    %67 = tpu.memref_slice %arg4[%c0_i32_39] : memref<8x!tpu.dma_semaphore, #tpu.memory_space<semaphore_mem>> -> memref<1x!tpu.dma_semaphore, #tpu.memory_space<semaphore_mem>>
    %68 = tpu.memref_squeeze %67 : memref<1x!tpu.dma_semaphore, #tpu.memory_space<semaphore_mem>> -> memref<!tpu.dma_semaphore, #tpu.memory_space<semaphore_mem>>
    tpu.wait_dma2 semaphore(%68 : memref<!tpu.dma_semaphore, #tpu.memory_space<semaphore_mem>>) src(%65 : memref<1x128xf32, #tpu.memory_space<any>>) dst(%66 : memref<1x128xf32, #tpu.memory_space<vmem>>)
    %c1_i32_44 = arith.constant 1 : i32
    %c0_i32_45 = arith.constant 0 : i32
    %c0_i32_46 = arith.constant 0 : i32
    %69 = tpu.memref_slice %arg2[%c0_i32_45, %c0_i32_46] : memref<256x128xf32, #tpu.memory_space<any>> -> memref<1x128xf32, #tpu.memory_space<any>>
    %c1_i32_47 = arith.constant 1 : i32
    %c0_i32_48 = arith.constant 0 : i32
    %70 = tpu.memref_slice %arg3[%c1_i32_47, %c0_i32_48] : memref<8x128xf32, #tpu.memory_space<vmem>> -> memref<1x128xf32, #tpu.memory_space<vmem>>
    %71 = tpu.memref_slice %arg4[%c1_i32_44] : memref<8x!tpu.dma_semaphore, #tpu.memory_space<semaphore_mem>> -> memref<1x!tpu.dma_semaphore, #tpu.memory_space<semaphore_mem>>
    %72 = tpu.memref_squeeze %71 : memref<1x!tpu.dma_semaphore, #tpu.memory_space<semaphore_mem>> -> memref<!tpu.dma_semaphore, #tpu.memory_space<semaphore_mem>>
    tpu.wait_dma2 semaphore(%72 : memref<!tpu.dma_semaphore, #tpu.memory_space<semaphore_mem>>) src(%69 : memref<1x128xf32, #tpu.memory_space<any>>) dst(%70 : memref<1x128xf32, #tpu.memory_space<vmem>>)
    %c2_i32_49 = arith.constant 2 : i32
    %c0_i32_50 = arith.constant 0 : i32
    %c0_i32_51 = arith.constant 0 : i32
    %73 = tpu.memref_slice %arg2[%c0_i32_50, %c0_i32_51] : memref<256x128xf32, #tpu.memory_space<any>> -> memref<1x128xf32, #tpu.memory_space<any>>
    %c2_i32_52 = arith.constant 2 : i32
    %c0_i32_53 = arith.constant 0 : i32
    %74 = tpu.memref_slice %arg3[%c2_i32_52, %c0_i32_53] : memref<8x128xf32, #tpu.memory_space<vmem>> -> memref<1x128xf32, #tpu.memory_space<vmem>>
    %75 = tpu.memref_slice %arg4[%c2_i32_49] : memref<8x!tpu.dma_semaphore, #tpu.memory_space<semaphore_mem>> -> memref<1x!tpu.dma_semaphore, #tpu.memory_space<semaphore_mem>>
    %76 = tpu.memref_squeeze %75 : memref<1x!tpu.dma_semaphore, #tpu.memory_space<semaphore_mem>> -> memref<!tpu.dma_semaphore, #tpu.memory_space<semaphore_mem>>
    tpu.wait_dma2 semaphore(%76 : memref<!tpu.dma_semaphore, #tpu.memory_space<semaphore_mem>>) src(%73 : memref<1x128xf32, #tpu.memory_space<any>>) dst(%74 : memref<1x128xf32, #tpu.memory_space<vmem>>)
    %c3_i32_54 = arith.constant 3 : i32
    %c0_i32_55 = arith.constant 0 : i32
    %c0_i32_56 = arith.constant 0 : i32
    %77 = tpu.memref_slice %arg2[%c0_i32_55, %c0_i32_56] : memref<256x128xf32, #tpu.memory_space<any>> -> memref<1x128xf32, #tpu.memory_space<any>>
    %c3_i32_57 = arith.constant 3 : i32
    %c0_i32_58 = arith.constant 0 : i32
    %78 = tpu.memref_slice %arg3[%c3_i32_57, %c0_i32_58] : memref<8x128xf32, #tpu.memory_space<vmem>> -> memref<1x128xf32, #tpu.memory_space<vmem>>
    %79 = tpu.memref_slice %arg4[%c3_i32_54] : memref<8x!tpu.dma_semaphore, #tpu.memory_space<semaphore_mem>> -> memref<1x!tpu.dma_semaphore, #tpu.memory_space<semaphore_mem>>
    %80 = tpu.memref_squeeze %79 : memref<1x!tpu.dma_semaphore, #tpu.memory_space<semaphore_mem>> -> memref<!tpu.dma_semaphore, #tpu.memory_space<semaphore_mem>>
    tpu.wait_dma2 semaphore(%80 : memref<!tpu.dma_semaphore, #tpu.memory_space<semaphore_mem>>) src(%77 : memref<1x128xf32, #tpu.memory_space<any>>) dst(%78 : memref<1x128xf32, #tpu.memory_space<vmem>>)
    %c4_i32_59 = arith.constant 4 : i32
    %c0_i32_60 = arith.constant 0 : i32
    %c0_i32_61 = arith.constant 0 : i32
    %81 = tpu.memref_slice %arg2[%c0_i32_60, %c0_i32_61] : memref<256x128xf32, #tpu.memory_space<any>> -> memref<1x128xf32, #tpu.memory_space<any>>
    %c4_i32_62 = arith.constant 4 : i32
    %c0_i32_63 = arith.constant 0 : i32
    %82 = tpu.memref_slice %arg3[%c4_i32_62, %c0_i32_63] : memref<8x128xf32, #tpu.memory_space<vmem>> -> memref<1x128xf32, #tpu.memory_space<vmem>>
    %83 = tpu.memref_slice %arg4[%c4_i32_59] : memref<8x!tpu.dma_semaphore, #tpu.memory_space<semaphore_mem>> -> memref<1x!tpu.dma_semaphore, #tpu.memory_space<semaphore_mem>>
    %84 = tpu.memref_squeeze %83 : memref<1x!tpu.dma_semaphore, #tpu.memory_space<semaphore_mem>> -> memref<!tpu.dma_semaphore, #tpu.memory_space<semaphore_mem>>
    tpu.wait_dma2 semaphore(%84 : memref<!tpu.dma_semaphore, #tpu.memory_space<semaphore_mem>>) src(%81 : memref<1x128xf32, #tpu.memory_space<any>>) dst(%82 : memref<1x128xf32, #tpu.memory_space<vmem>>)
    %c5_i32_64 = arith.constant 5 : i32
    %c0_i32_65 = arith.constant 0 : i32
    %c0_i32_66 = arith.constant 0 : i32
    %85 = tpu.memref_slice %arg2[%c0_i32_65, %c0_i32_66] : memref<256x128xf32, #tpu.memory_space<any>> -> memref<1x128xf32, #tpu.memory_space<any>>
    %c5_i32_67 = arith.constant 5 : i32
    %c0_i32_68 = arith.constant 0 : i32
    %86 = tpu.memref_slice %arg3[%c5_i32_67, %c0_i32_68] : memref<8x128xf32, #tpu.memory_space<vmem>> -> memref<1x128xf32, #tpu.memory_space<vmem>>
    %87 = tpu.memref_slice %arg4[%c5_i32_64] : memref<8x!tpu.dma_semaphore, #tpu.memory_space<semaphore_mem>> -> memref<1x!tpu.dma_semaphore, #tpu.memory_space<semaphore_mem>>
    %88 = tpu.memref_squeeze %87 : memref<1x!tpu.dma_semaphore, #tpu.memory_space<semaphore_mem>> -> memref<!tpu.dma_semaphore, #tpu.memory_space<semaphore_mem>>
    tpu.wait_dma2 semaphore(%88 : memref<!tpu.dma_semaphore, #tpu.memory_space<semaphore_mem>>) src(%85 : memref<1x128xf32, #tpu.memory_space<any>>) dst(%86 : memref<1x128xf32, #tpu.memory_space<vmem>>)
    %c6_i32_69 = arith.constant 6 : i32
    %c0_i32_70 = arith.constant 0 : i32
    %c0_i32_71 = arith.constant 0 : i32
    %89 = tpu.memref_slice %arg2[%c0_i32_70, %c0_i32_71] : memref<256x128xf32, #tpu.memory_space<any>> -> memref<1x128xf32, #tpu.memory_space<any>>
    %c6_i32_72 = arith.constant 6 : i32
    %c0_i32_73 = arith.constant 0 : i32
    %90 = tpu.memref_slice %arg3[%c6_i32_72, %c0_i32_73] : memref<8x128xf32, #tpu.memory_space<vmem>> -> memref<1x128xf32, #tpu.memory_space<vmem>>
    %91 = tpu.memref_slice %arg4[%c6_i32_69] : memref<8x!tpu.dma_semaphore, #tpu.memory_space<semaphore_mem>> -> memref<1x!tpu.dma_semaphore, #tpu.memory_space<semaphore_mem>>
    %92 = tpu.memref_squeeze %91 : memref<1x!tpu.dma_semaphore, #tpu.memory_space<semaphore_mem>> -> memref<!tpu.dma_semaphore, #tpu.memory_space<semaphore_mem>>
    tpu.wait_dma2 semaphore(%92 : memref<!tpu.dma_semaphore, #tpu.memory_space<semaphore_mem>>) src(%89 : memref<1x128xf32, #tpu.memory_space<any>>) dst(%90 : memref<1x128xf32, #tpu.memory_space<vmem>>)
    %c7_i32_74 = arith.constant 7 : i32
    %c0_i32_75 = arith.constant 0 : i32
    %c0_i32_76 = arith.constant 0 : i32
    %93 = tpu.memref_slice %arg2[%c0_i32_75, %c0_i32_76] : memref<256x128xf32, #tpu.memory_space<any>> -> memref<1x128xf32, #tpu.memory_space<any>>
    %c7_i32_77 = arith.constant 7 : i32
    %c0_i32_78 = arith.constant 0 : i32
    %94 = tpu.memref_slice %arg3[%c7_i32_77, %c0_i32_78] : memref<8x128xf32, #tpu.memory_space<vmem>> -> memref<1x128xf32, #tpu.memory_space<vmem>>
    %95 = tpu.memref_slice %arg4[%c7_i32_74] : memref<8x!tpu.dma_semaphore, #tpu.memory_space<semaphore_mem>> -> memref<1x!tpu.dma_semaphore, #tpu.memory_space<semaphore_mem>>
    %96 = tpu.memref_squeeze %95 : memref<1x!tpu.dma_semaphore, #tpu.memory_space<semaphore_mem>> -> memref<!tpu.dma_semaphore, #tpu.memory_space<semaphore_mem>>
    tpu.wait_dma2 semaphore(%96 : memref<!tpu.dma_semaphore, #tpu.memory_space<semaphore_mem>>) src(%93 : memref<1x128xf32, #tpu.memory_space<any>>) dst(%94 : memref<1x128xf32, #tpu.memory_space<vmem>>)
    return
  }
  func.func @transform_1(%arg0: i32, %arg1: memref<16xi32, #tpu.memory_space<smem>>) -> (i32, i32) {
    %c0_i32 = arith.constant 0 : i32
    %c0_i32_0 = arith.constant 0 : i32
    return %arg0, %c0_i32 : i32, i32
  }
}

</mosaic_0001>

<llo_original>
// kernel: tpu_custom_call.1
$region0: #{tpu_custom_call.1}
  #allocation0 [shape = 'u32[]', space=smem, size = 0x4, offset = 0x4, fixed_abs, tag = 'smem constant byte address 0x4 - core index']
  #allocation1 [shape = 'u32[144,128]{1,0:T(1,128)}', space=vmem, size = 0x12000, scoped, tag = 'internal scratch']
  #allocation2 [shape = 's32[8]{0}', space=sflag, size = 0x20, scoped, tag = 'scratch operand']
  #allocation3 [shape = 's32[1]{0}', space=sflag, size = 0x4, scoped, tag = 'scoped memory for tpu_custom_call.1']
  #allocation4 [shape = 'u8[512]{0}', space=smem, size = 0x200, scoped, tag = 'prefetched SMEM operand 0']
  #allocation7 [shape = 's32[]', space=sflag, size = 0x4, offset = 0, fixed_abs, tag = 'sflag constant byte address 0x0 - dummy sync flag']
  #allocation8 [shape = 's32[]', space=sflag, size = 0x4, offset = 0, fixed_abs, tag = 'sflag constant byte address 0x0 - dummy sync flag']
  #allocation9 [shape = 'u32[]', space=smem, size = 0x4, offset = 0x44, fixed_abs, tag = 'smem constant byte address 0x44 - assertion arg 0']
  #allocation10 [shape = 'u32[]', space=smem, size = 0x4, offset = 0x48, fixed_abs, tag = 'smem constant byte address 0x48 - assertion arg 1']
  #allocation11 [shape = 's32[]', space=sflag, size = 0x4, offset = 0, fixed_abs, tag = 'sflag constant byte address 0x0 - dummy sync flag']
  #allocation12 [shape = 's32[]', space=sflag, size = 0x4, offset = 0, fixed_abs, tag = 'sflag constant byte address 0x0 - dummy sync flag']
  #allocation13 [shape = 's32[]', space=sflag, size = 0x4, offset = 0, fixed_abs, tag = 'sflag constant byte address 0x0 - dummy sync flag']
  #allocation14 [shape = 's32[]', space=sflag, size = 0x4, offset = 0, fixed_abs, tag = 'sflag constant byte address 0x0 - dummy sync flag']
  #allocation15 [shape = 's32[]', space=sflag, size = 0x4, offset = 0, fixed_abs, tag = 'sflag constant byte address 0x0 - dummy sync flag']
  #allocation16 [shape = 's32[]', space=sflag, size = 0x4, offset = 0, fixed_abs, tag = 'sflag constant byte address 0x0 - dummy sync flag']
  #allocation17 [shape = 's32[]', space=sflag, size = 0x4, offset = 0, fixed_abs, tag = 'sflag constant byte address 0x0 - dummy sync flag']
  #allocation18 [shape = 's32[]', space=sflag, size = 0x4, offset = 0, fixed_abs, tag = 'sflag constant byte address 0x0 - dummy sync flag']
  #allocation19 [shape = 's32[]', space=sflag, size = 0x4, offset = 0, fixed_abs, tag = 'sflag constant byte address 0x0 - dummy sync flag']
  #allocation20 [shape = 's32[]', space=sflag, size = 0x4, offset = 0, fixed_abs, tag = 'sflag constant byte address 0x0 - dummy sync flag']
  #allocation21 [shape = 's32[]', space=sflag, size = 0x4, offset = 0, fixed_abs, tag = 'sflag constant byte address 0x0 - dummy sync flag']
  #allocation22 [shape = 's32[]', space=sflag, size = 0x4, offset = 0, fixed_abs, tag = 'sflag constant byte address 0x0 - dummy sync flag']
  #allocation23 [shape = 's32[]', space=sflag, size = 0x4, offset = 0, fixed_abs, tag = 'sflag constant byte address 0x0 - dummy sync flag']
  #allocation24 [shape = 's32[]', space=sflag, size = 0x4, offset = 0, fixed_abs, tag = 'sflag constant byte address 0x0 - dummy sync flag']
  %s0 = inlined_call_operand.hbm [shape: s32[16], index: 0, kind: input, shape index: {}]
  %s1 = inlined_call_operand.hbm [shape: f32[256,128], index: 1, kind: input, shape index: {}]
  %s2 = inlined_call_operand.hbm [shape: f32[16,128], index: 2, kind: output, shape index: {}]
  %s3 = sld [smem:[#allocation0]]
  $region57: #{tpu_custom_call.1} parent=0
    _
  %s5 = ssub.s32 1, %s3
  %s6 = scalar_select 0, %s5, %s3
  %8 = dma.hbm_to_smem %s0, 16, [#allocation4], [#allocation3]
  %9 = dma.done [#allocation3], 16
  %10 = sfence
  $region1: #{tpu_custom_call.1} parent=0
    #allocation5 [shape = 'u8[8192]{0}', space=vmem, size = 0x2000, scoped, tag = 'output window, operand 0']
    #allocation6 [shape = 's32[2]{0}', space=sflag, size = 0x8, scoped, tag = 'scoped memory for tpu_custom_call.1']
    %11 = vsyncpa [#allocation6], 0
    %s12 = scalar_lea.sflag [#allocation6], 1
    %13 = vsyncpa %s12, 0
    loop: start=0, step=1, limit=3
    $region2: #{tpu_custom_call.1} parent=1 // loop_pre_header
      _
    $region3: #{tpu_custom_call.1} parent=1 // loop_header
      %s15 = sphi 0, %s19
      %p16 = scmp.ge.s32.totalorder %s15, 3
      %s24 = sphi 0, %s26
      %s27 = sphi 0, %s24
      %s37 = sphi 0, %s27
    $region4: #{tpu_custom_call.1} parent=1 // loop_header_branch
      %18 = sbr.rel (%p16) target = $region8
    $region5: #{tpu_custom_call.1} parent=1 // loop_body
      %s20 = ssub.s32 %s15, 1
      %s21 = sadd.s32 %s15, 1
      %s22 = ssub.s32 %s15, %s21
      %p23 = scmp.eq.s32.totalorder %s22, 0
      %s25 = sadd.s32 %s24, 1
      %s26 = scalar_select %p23, %s24, %s25
      %p28 = pneg %p23
      %p29 = scmp.eq.s32.totalorder %s15, 1
      %p30 = por %p28, %p29
      %p31 = scmp.ne.s32.totalorder %s24, %s27
      %p32 = scmp.eq.s32.totalorder %s15, 0
      %p33 = por %p31, %p32
      %p34 = scmp.ne.s32.totalorder %s24, %s27
      %p35 = scmp.eq.s32.totalorder %s20, 1
      %p36 = por %p34, %p35
      %p38 = scmp.ne.s32.totalorder %s27, %s37
      %p39 = scmp.eq.s32.totalorder %s20, 0
      %p40 = por %p38, %p39
      %p41 = scmp.lt.s32.totalorder %s15, 2
      // Predicated region
      $region9: #{tpu_custom_call.1} parent=5 // pred_check
        %p42 = pneg %p41
      $region10: #{tpu_custom_call.1} parent=5 // pred_check_branch
        %44 = sbr.rel (%p42) target = $region12
      $region11: #{tpu_custom_call.1} parent=5 // pred_region
        %p45 = pneg %p33
        %p46 = pneg %p30
        %s47 = sand.u32 %s24, 1
        %s48 = scalar_lea.sflag [#allocation6], %s47
        %s49 = sand.u32 %s24, 1
        %s50 = smul.addr %s49, 8
        %s51 = scalar_lea.vmem [#allocation5], %s50
        %s52 = smul.u32 %s15, 8
        %s53 = sld [smem:[#allocation4 + %s52]]
        %p54 = scmp.lt.s32.totalorder %s53, 255
        %s55 = scalar_select %p54, %s53, 255
        %s56 = smul.addr %s55, 16
        %s57 = scalar_lea.hbm %s1, %s56
        // Predicated region
        $region13: #{tpu_custom_call.1} parent=11 // pred_check
          _
        $region14: #{tpu_custom_call.1} parent=11 // pred_check_branch
          %59 = sbr.rel target = $region16
        $region15: #{tpu_custom_call.1} parent=11 // pred_region
          %60 = sst [smem:[#allocation9]] [#allocation8]
          %61 = sst [smem:[#allocation10]] [#allocation7]
        $region16: #{tpu_custom_call.1} parent=11 // pred_fallthru
          _
        %63 = shalt.err (0)
        %s65 = sshll.u32 %s51, 4
        %s66 = int_to_ptr.vmem [resolvable:$true] %s65
        %68 = dma.hbm_to_vmem [thread:$0]  %s57, 16, %s66, [#allocation2]
        %s69 = sadd.s32 %s52, 1
        %s70 = sld [smem:[#allocation4 + %s69]]
        %p71 = scmp.lt.s32.totalorder %s70, 255
        %s72 = scalar_select %p71, %s70, 255
        %s73 = smul.addr %s72, 16
        %s74 = scalar_lea.hbm %s1, %s73
        %s75 = scalar_lea.vmem %s51, 1 [#allocation5]
        %s76 = scalar_lea.sflag [#allocation2], 1
        // Predicated region
        $region17: #{tpu_custom_call.1} parent=11 // pred_check
          _
        $region18: #{tpu_custom_call.1} parent=11 // pred_check_branch
          %78 = sbr.rel target = $region20
        $region19: #{tpu_custom_call.1} parent=11 // pred_region
          %79 = sst [smem:[#allocation9]] [#allocation12]
          %80 = sst [smem:[#allocation10]] [#allocation11]
        $region20: #{tpu_custom_call.1} parent=11 // pred_fallthru
          _
        %82 = shalt.err (0)
        %s84 = sshll.u32 %s75, 4
        %s85 = int_to_ptr.vmem [resolvable:$true] %s84
        %87 = dma.hbm_to_vmem [thread:$0]  %s74, 16, %s85, %s76
        %s88 = sadd.s32 %s52, 2
        %s89 = sld [smem:[#allocation4 + %s88]]
        %p90 = scmp.lt.s32.totalorder %s89, 255
        %s91 = scalar_select %p90, %s89, 255
        %s92 = smul.addr %s91, 16
        %s93 = scalar_lea.hbm %s1, %s92
        %s94 = scalar_lea.vmem %s51, 2 [#allocation5]
        %s95 = scalar_lea.sflag [#allocation2], 2
        // Predicated region
        $region21: #{tpu_custom_call.1} parent=11 // pred_check
          _
        $region22: #{tpu_custom_call.1} parent=11 // pred_check_branch
          %97 = sbr.rel target = $region24
        $region23: #{tpu_custom_call.1} parent=11 // pred_region
          %98 = sst [smem:[#allocation9]] [#allocation14]
          %99 = sst [smem:[#allocation10]] [#allocation13]
        $region24: #{tpu_custom_call.1} parent=11 // pred_fallthru
          _
        %101 = shalt.err (0)
        %s103 = sshll.u32 %s94, 4
        %s104 = int_to_ptr.vmem [resolvable:$true] %s103
        %106 = dma.hbm_to_vmem [thread:$0]  %s93, 16, %s104, %s95
        %s107 = sadd.s32 %s52, 3
        %s108 = sld [smem:[#allocation4 + %s107]]
        %p109 = scmp.lt.s32.totalorder %s108, 255
        %s110 = scalar_select %p109, %s108, 255
        %s111 = smul.addr %s110, 16
        %s112 = scalar_lea.hbm %s1, %s111
        %s113 = scalar_lea.vmem %s51, 3 [#allocation5]
        %s114 = scalar_lea.sflag [#allocation2], 3
        // Predicated region
        $region25: #{tpu_custom_call.1} parent=11 // pred_check
          _
        $region26: #{tpu_custom_call.1} parent=11 // pred_check_branch
          %116 = sbr.rel target = $region28
        $region27: #{tpu_custom_call.1} parent=11 // pred_region
          %117 = sst [smem:[#allocation9]] [#allocation16]
          %118 = sst [smem:[#allocation10]] [#allocation15]
        $region28: #{tpu_custom_call.1} parent=11 // pred_fallthru
          _
        %120 = shalt.err (0)
        %s122 = sshll.u32 %s113, 4
        %s123 = int_to_ptr.vmem [resolvable:$true] %s122
        %125 = dma.hbm_to_vmem [thread:$0]  %s112, 16, %s123, %s114
        %s126 = sadd.s32 %s52, 4
        %s127 = sld [smem:[#allocation4 + %s126]]
        %p128 = scmp.lt.s32.totalorder %s127, 255
        %s129 = scalar_select %p128, %s127, 255
        %s130 = smul.addr %s129, 16
        %s131 = scalar_lea.hbm %s1, %s130
        %s132 = scalar_lea.vmem %s51, 4 [#allocation5]
        %s133 = scalar_lea.sflag [#allocation2], 4
        // Predicated region
        $region29: #{tpu_custom_call.1} parent=11 // pred_check
          _
        $region30: #{tpu_custom_call.1} parent=11 // pred_check_branch
          %135 = sbr.rel target = $region32
        $region31: #{tpu_custom_call.1} parent=11 // pred_region
          %136 = sst [smem:[#allocation9]] [#allocation18]
          %137 = sst [smem:[#allocation10]] [#allocation17]
        $region32: #{tpu_custom_call.1} parent=11 // pred_fallthru
          _
        %139 = shalt.err (0)
        %s141 = sshll.u32 %s132, 4
        %s142 = int_to_ptr.vmem [resolvable:$true] %s141
        %144 = dma.hbm_to_vmem [thread:$0]  %s131, 16, %s142, %s133
        %s145 = sadd.s32 %s52, 5
        %s146 = sld [smem:[#allocation4 + %s145]]
        %p147 = scmp.lt.s32.totalorder %s146, 255
        %s148 = scalar_select %p147, %s146, 255
        %s149 = smul.addr %s148, 16
        %s150 = scalar_lea.hbm %s1, %s149
        %s151 = scalar_lea.vmem %s51, 5 [#allocation5]
        %s152 = scalar_lea.sflag [#allocation2], 5
        // Predicated region
        $region33: #{tpu_custom_call.1} parent=11 // pred_check
          _
        $region34: #{tpu_custom_call.1} parent=11 // pred_check_branch
          %154 = sbr.rel target = $region36
        $region35: #{tpu_custom_call.1} parent=11 // pred_region
          %155 = sst [smem:[#allocation9]] [#allocation20]
          %156 = sst [smem:[#allocation10]] [#allocation19]
        $region36: #{tpu_custom_call.1} parent=11 // pred_fallthru
          _
        %158 = shalt.err (0)
        %s160 = sshll.u32 %s151, 4
        %s161 = int_to_ptr.vmem [resolvable:$true] %s160
        %163 = dma.hbm_to_vmem [thread:$0]  %s150, 16, %s161, %s152
        %s164 = sadd.s32 %s52, 6
        %s165 = sld [smem:[#allocation4 + %s164]]
        %p166 = scmp.lt.s32.totalorder %s165, 255
        %s167 = scalar_select %p166, %s165, 255
        %s168 = smul.addr %s167, 16
        %s169 = scalar_lea.hbm %s1, %s168
        %s170 = scalar_lea.vmem %s51, 6 [#allocation5]
        %s171 = scalar_lea.sflag [#allocation2], 6
        // Predicated region
        $region37: #{tpu_custom_call.1} parent=11 // pred_check
          _
        $region38: #{tpu_custom_call.1} parent=11 // pred_check_branch
          %173 = sbr.rel target = $region40
        $region39: #{tpu_custom_call.1} parent=11 // pred_region
          %174 = sst [smem:[#allocation9]] [#allocation22]
          %175 = sst [smem:[#allocation10]] [#allocation21]
        $region40: #{tpu_custom_call.1} parent=11 // pred_fallthru
          _
        %177 = shalt.err (0)
        %s179 = sshll.u32 %s170, 4
        %s180 = int_to_ptr.vmem [resolvable:$true] %s179
        %182 = dma.hbm_to_vmem [thread:$0]  %s169, 16, %s180, %s171
        %s183 = sadd.s32 %s52, 7
        %s184 = sld [smem:[#allocation4 + %s183]]
        %p185 = scmp.lt.s32.totalorder %s184, 255
        %s186 = scalar_select %p185, %s184, 255
        %s187 = smul.addr %s186, 16
        %s188 = scalar_lea.hbm %s1, %s187
        %s189 = scalar_lea.vmem %s51, 7 [#allocation5]
        %s190 = scalar_lea.sflag [#allocation2], 7
        // Predicated region
        $region41: #{tpu_custom_call.1} parent=11 // pred_check
          _
        $region42: #{tpu_custom_call.1} parent=11 // pred_check_branch
          %192 = sbr.rel target = $region44
        $region43: #{tpu_custom_call.1} parent=11 // pred_region
          %193 = sst [smem:[#allocation9]] [#allocation24]
          %194 = sst [smem:[#allocation10]] [#allocation23]
        $region44: #{tpu_custom_call.1} parent=11 // pred_fallthru
          _
        %196 = shalt.err (0)
        %s198 = sshll.u32 %s189, 4
        %s199 = int_to_ptr.vmem [resolvable:$true] %s198
        %201 = dma.hbm_to_vmem [thread:$0]  %s188, 16, %s199, %s190
        %s202 = smul.u32 1, 1
        %s203 = sshll.u32 %s202, 4
        %204 = dma.done [#allocation2], %s203
        %s205 = sshll.u32 %s202, 4
        %206 = dma.done %s76, %s205
        %s207 = sshll.u32 %s202, 4
        %208 = dma.done %s95, %s207
        %s209 = sshll.u32 %s202, 4
        %210 = dma.done %s114, %s209
        %s211 = sshll.u32 %s202, 4
        %212 = dma.done %s133, %s211
        %s213 = sshll.u32 %s202, 4
        %214 = dma.done %s152, %s213
        %s215 = sshll.u32 %s202, 4
        %216 = dma.done %s171, %s215
        %s217 = sshll.u32 %s202, 4
        %218 = dma.done %s190, %s217
        %s219 = sand.u32 %s24, 1
        %s220 = scalar_lea.sflag [#allocation6], %s219
        %s221 = sand.u32 %s24, 1
        %s222 = smul.addr %s221, 8
        %s223 = scalar_lea.vmem [#allocation5], %s222
        // Predicated region
        $region45: #{tpu_custom_call.1} parent=11 // pred_check
          %p224 = pneg %p30
        $region46: #{tpu_custom_call.1} parent=11 // pred_check_branch
          %226 = sbr.rel (%p224) target = $region48
        $region47: #{tpu_custom_call.1} parent=11 // pred_region
          %s228 = ssub.s32 128, 128
          %229 = vsyncadd %s220, %s228
          %s230 = smul.addr %s15, 128
          %s231 = scalar_lea.hbm %s2, %s230
          %s233 = sshll.u32 %s223, 4
          %s234 = int_to_ptr.vmem [resolvable:$true] %s233
          %236 = dma.vmem_to_hbm [thread:$0]  %s234, 128, %s231, %s220
        $region48: #{tpu_custom_call.1} parent=11 // pred_fallthru
          _
      $region12: #{tpu_custom_call.1} parent=5 // pred_fallthru
        _
      %p237 = scmp.le.s32.totalorder 1, %s15
      // Predicated region
      $region49: #{tpu_custom_call.1} parent=5 // pred_check
        %p238 = pneg %p237
      $region50: #{tpu_custom_call.1} parent=5 // pred_check_branch
        %240 = sbr.rel (%p238) target = $region52
      $region51: #{tpu_custom_call.1} parent=5 // pred_region
        %s241 = ssub.s32 %s15, 1
        // Predicated region
        $region53: #{tpu_custom_call.1} parent=51 // pred_check
          %p242 = pneg %p36
        $region54: #{tpu_custom_call.1} parent=51 // pred_check_branch
          %244 = sbr.rel (%p242) target = $region56
        $region55: #{tpu_custom_call.1} parent=51 // pred_region
          %s245 = sand.u32 %s27, 1
          %s246 = scalar_lea.sflag [#allocation6], %s245
          %s247 = sand.u32 %s27, 1
          %s248 = smul.addr %s247, 8
          %s249 = scalar_lea.vmem [#allocation5], %s248
          %250 = dma.done %s246, 128
        $region56: #{tpu_custom_call.1} parent=51 // pred_fallthru
          _
      $region52: #{tpu_custom_call.1} parent=5 // pred_fallthru
        _
    $region6: #{tpu_custom_call.1} parent=1 // loop_footer
      %s19 = sadd.s32 1, %s15
    $region7: #{tpu_custom_call.1} parent=1 // loop_footer_branch
      %14 = sbr.rel target = $region3
    $region8: #{tpu_custom_call.1} parent=1 // loop_exit
      _
    %251 = vsyncpa [#allocation6], 1
    %s252 = scalar_lea.sflag [#allocation6], 1
    %253 = vsyncpa %s252, 1
  %254 = vsyncmov [#allocation2]
  %s255 = vpop.sfrf %254
  %p256 = scmp.eq.s32.totalorder %s255, 0
  %p257 = pneg %p256
  %259 = shalt.err (%p257)
  %s260 = scalar_lea.sflag [#allocation2], 1
  %261 = vsyncmov %s260
  %s262 = vpop.sfrf %261
  %p263 = scmp.eq.s32.totalorder %s262, 0
  %p264 = pneg %p263
  %266 = shalt.err (%p264)
  %s267 = scalar_lea.sflag [#allocation2], 2
  %268 = vsyncmov %s267
  %s269 = vpop.sfrf %268
  %p270 = scmp.eq.s32.totalorder %s269, 0
  %p271 = pneg %p270
  %273 = shalt.err (%p271)
  %s274 = scalar_lea.sflag [#allocation2], 3
  %275 = vsyncmov %s274
  %s276 = vpop.sfrf %275
  %p277 = scmp.eq.s32.totalorder %s276, 0
  %p278 = pneg %p277
  %280 = shalt.err (%p278)
  %s281 = scalar_lea.sflag [#allocation2], 4
  %282 = vsyncmov %s281
  %s283 = vpop.sfrf %282
  %p284 = scmp.eq.s32.totalorder %s283, 0
  %p285 = pneg %p284
  %287 = shalt.err (%p285)
  %s288 = scalar_lea.sflag [#allocation2], 5
  %289 = vsyncmov %s288
  %s290 = vpop.sfrf %289
  %p291 = scmp.eq.s32.totalorder %s290, 0
  %p292 = pneg %p291
  %294 = shalt.err (%p292)
  %s295 = scalar_lea.sflag [#allocation2], 6
  %296 = vsyncmov %s295
  %s297 = vpop.sfrf %296
  %p298 = scmp.eq.s32.totalorder %s297, 0
  %p299 = pneg %p298
  %301 = shalt.err (%p299)
  %s302 = scalar_lea.sflag [#allocation2], 7
  %303 = vsyncmov %s302
  %s304 = vpop.sfrf %303
  %p305 = scmp.eq.s32.totalorder %s304, 0
  %p306 = pneg %p305
  %308 = shalt.err (%p306)

</llo_original>
